<compile_context>
chip_gen: v6e
topology: v6e:2x2x1
jax: 0.10.0
libtpu: 0.0.40
codegen_flags: <defaults>
</compile_context>

<pallas_src>
import math
import functools

import jax
import jax.numpy as jnp
from jax import lax
from jax.experimental import pallas as pl
from jax.experimental.pallas import tpu as pltpu


def _round_up(v, m):
    return ((v + m - 1) // m) * m


# ----------------------------------------------------------------------------
# Fused FinalLayer kernel: adaLN(SiLU->matmul) + LayerNorm + modulate + projection
# ----------------------------------------------------------------------------
def _final_layer_kernel(x_ref, c_ref, w_sh_ref, w_sc_ref, b_sh_ref, b_sc_ref,
                        w_out_ref, b_out_ref, o_ref, *, eps):
    # --- adaLN modulation: SiLU(c) @ W + b, weights pre-split into shift/scale halves ---
    c = c_ref[...].astype(jnp.float32)
    c_act = (c * jax.nn.sigmoid(c)).astype(jnp.bfloat16)          # SiLU in f32, bf16 to MXU
    shift = jnp.dot(c_act, w_sh_ref[...],
                    preferred_element_type=jnp.float32) + b_sh_ref[...]
    scale = jnp.dot(c_act, w_sc_ref[...],
                    preferred_element_type=jnp.float32) + b_sc_ref[...]

    # --- LayerNorm (no affine, eps=1e-6) + modulate, f32 on the VPU ---
    x = x_ref[...].astype(jnp.float32)
    mu = jnp.mean(x, axis=-1, keepdims=True)
    var = jnp.mean((x - mu) ** 2, axis=-1, keepdims=True)
    xn = (x - mu) * lax.rsqrt(var + eps)
    h = xn * (1.0 + scale) + shift

    # --- output projection (lane-padded Nout -> unmasked stores) ---
    y = jnp.dot(h.astype(jnp.bfloat16), w_out_ref[...],
                preferred_element_type=jnp.float32) + b_out_ref[...]
    o_ref[...] = y


# ----------------------------------------------------------------------------
# Parameter prep (one-time: casts / splits / lane padding hoisted out of the call)
# ----------------------------------------------------------------------------
def prepare_final_layer_params(params):
    D = params["ada_w"].shape[0]
    Dout = params["lin_w"].shape[1]
    Dout_pad = _round_up(Dout, 128)

    w_ada = params["ada_w"].astype(jnp.bfloat16)                  # (D, 2D)
    b_ada = params["ada_b"].astype(jnp.float32)                   # (2D,)
    w_sh, w_sc = w_ada[:, :D], w_ada[:, D:]
    b_sh, b_sc = b_ada[:D].reshape(1, D), b_ada[D:].reshape(1, D)

    w_out = jnp.zeros((D, Dout_pad), jnp.bfloat16)
    w_out = w_out.at[:, :Dout].set(params["lin_w"].astype(jnp.bfloat16))
    b_out = jnp.zeros((1, Dout_pad), jnp.float32)
    b_out = b_out.at[0, :Dout].set(params["lin_b"].astype(jnp.float32))

    return dict(w_sh=w_sh, w_sc=w_sc, b_sh=b_sh, b_sc=b_sc,
                w_out=w_out, b_out=b_out,
                hidden=D, out_channels=Dout, out_pad=Dout_pad)


# ----------------------------------------------------------------------------
# Wrapper
# ----------------------------------------------------------------------------
def final_layer(x, c, prep, *, eps=1e-6, block_rows=256):
    """x: (..., D) float32, c broadcastable to x's shape. Returns (..., out_channels)."""
    D = prep["hidden"]
    Dout = prep["out_channels"]
    Dout_pad = prep["out_pad"]

    lead = x.shape[:-1]
    c = jnp.broadcast_to(c, lead + (D,))
    M = math.prod(lead)

    x2 = x.reshape(M, D).astype(jnp.float32)
    c2 = c.reshape(M, D).astype(jnp.float32)

    # Fixed row tile; pad rows up instead of shrinking the tile (padded rows are cheap).
    tm = block_rows
    if M < tm:
        tm = max(8, _round_up(M, 8))
    Mpad = _round_up(M, tm)
    if Mpad != M:
        x2 = jnp.pad(x2, ((0, Mpad - M), (0, 0)))
        c2 = jnp.pad(c2, ((0, Mpad - M), (0, 0)))

    out = pl.pallas_call(
        functools.partial(_final_layer_kernel, eps=eps),
        out_shape=jax.ShapeDtypeStruct((Mpad, Dout_pad), jnp.float32),
        grid=(Mpad // tm,),
        in_specs=[
            pl.BlockSpec((tm, D), lambda i: (i, 0)),        # x row tile
            pl.BlockSpec((tm, D), lambda i: (i, 0)),        # c row tile
            pl.BlockSpec((D, D), lambda i: (0, 0)),         # W_shift (bf16)
            pl.BlockSpec((D, D), lambda i: (0, 0)),         # W_scale (bf16)
            pl.BlockSpec((1, D), lambda i: (0, 0)),         # b_shift
            pl.BlockSpec((1, D), lambda i: (0, 0)),         # b_scale
            pl.BlockSpec((D, Dout_pad), lambda i: (0, 0)),  # W_out (lane-padded, bf16)
            pl.BlockSpec((1, Dout_pad), lambda i: (0, 0)),  # b_out (lane-padded)
        ],
        out_specs=pl.BlockSpec((tm, Dout_pad), lambda i: (i, 0)),
        compiler_params=pltpu.CompilerParams(
            dimension_semantics=("parallel",),
            vmem_limit_bytes=64 * 1024 * 1024,
        ),
    )(x2, c2, prep["w_sh"], prep["w_sc"], prep["b_sh"], prep["b_sc"],
      prep["w_out"], prep["b_out"])

    return out[:M, :Dout].reshape(lead + (Dout,))


# ----------------------------------------------------------------------------
# Pure-JAX f32 reference (matches the PyTorch module)
# ----------------------------------------------------------------------------
def final_layer_ref(x, c, params, eps=1e-6):
    c = jnp.broadcast_to(c, x.shape)
    mod = jax.nn.silu(c) @ params["ada_w"] + params["ada_b"]
    shift, scale = jnp.split(mod, 2, axis=-1)
    mu = jnp.mean(x, axis=-1, keepdims=True)
    var = jnp.mean((x - mu) ** 2, axis=-1, keepdims=True)   # biased variance (torch LN)
    xn = (x - mu) * lax.rsqrt(var + eps)
    h = xn * (1.0 + scale) + shift
    return h @ params["lin_w"] + params["lin_b"]


# ----------------------------------------------------------------------------
# Deterministic synthetic params (torch nn.Linear default init ranges)
# ----------------------------------------------------------------------------
def init_final_layer_params(key, hidden, out_channels):
    k1, k2, k3, k4 = jax.random.split(key, 4)
    lim = 1.0 / math.sqrt(hidden)
    return {
        "ada_w": jax.random.uniform(k1, (hidden, 2 * hidden), jnp.float32, -lim, lim),
        "ada_b": jax.random.uniform(k2, (2 * hidden,), jnp.float32, -lim, lim),
        "lin_w": jax.random.uniform(k3, (hidden, out_channels), jnp.float32, -lim, lim),
        "lin_b": jax.random.uniform(k4, (out_channels,), jnp.float32, -lim, lim),
    }


# ----------------------------------------------------------------------------
if __name__ == "__main__":
    hidden, patch_size, out_channels = 32, 1, 1
    N, T = 2, 24

    key = jax.random.PRNGKey(0)
    kp, kx, kc = jax.random.split(key, 3)
    params = init_final_layer_params(kp, hidden, out_channels)
    prep = prepare_final_layer_params(params)

    x = jax.random.normal(kx, (N, T, hidden), jnp.float32)
    # conditioning: per-batch t_emb broadcast over the sequence (as in the source model)
    c = jax.random.normal(kc, (N, 1, hidden), jnp.float32)
    c = jnp.broadcast_to(c, (N, T, hidden))

    out = final_layer(x, c, prep)
    jax.block_until_ready(out)
    assert out.shape == (N, T, out_channels)

    ref = final_layer_ref(x, c, params)
    rel_err = float(jnp.max(jnp.abs(out - ref)) / (jnp.max(jnp.abs(ref)) + 1e-6))
    assert rel_err < 5e-2, f"mismatch vs reference: rel err {rel_err}"

    print("KERNEL_OK")
</pallas_src>

<mosaic_0001>
module attributes {stable_mosaic.version = 11 : i64} {
  func.func @_final_layer_kernel(%arg0: i32, %arg1: memref<48x32xf32, #tpu.memory_space<vmem>>, %arg2: memref<48x32xf32, #tpu.memory_space<vmem>>, %arg3: memref<32x32xbf16, #tpu.memory_space<vmem>>, %arg4: memref<32x32xbf16, #tpu.memory_space<vmem>>, %arg5: memref<1x32xf32, #tpu.memory_space<vmem>>, %arg6: memref<1x32xf32, #tpu.memory_space<vmem>>, %arg7: memref<32x128xbf16, #tpu.memory_space<vmem>>, %arg8: memref<1x128xf32, #tpu.memory_space<vmem>>, %arg9: memref<48x128xf32, #tpu.memory_space<vmem>>) attributes {dimension_semantics = [#tpu.dimension_semantics<parallel>], iteration_bounds = array<i64: 1>, scalar_prefetch = 0 : i64, scratch_operands = 0 : i64, tpu.core_type = #tpu.core_type<tc>, window_params = [{transform_indices = @transform_0, window_bounds = array<i64: 48, 32>}, {transform_indices = @transform_1, window_bounds = array<i64: 48, 32>}, {pipeline_mode = #tpu.pipeline_mode<synchronous>, transform_indices = @transform_2, window_bounds = array<i64: 32, 32>}, {pipeline_mode = #tpu.pipeline_mode<synchronous>, transform_indices = @transform_3, window_bounds = array<i64: 32, 32>}, {pipeline_mode = #tpu.pipeline_mode<synchronous>, transform_indices = @transform_4, window_bounds = array<i64: 1, 32>}, {pipeline_mode = #tpu.pipeline_mode<synchronous>, transform_indices = @transform_5, window_bounds = array<i64: 1, 32>}, {pipeline_mode = #tpu.pipeline_mode<synchronous>, transform_indices = @transform_6, window_bounds = array<i64: 32, 128>}, {pipeline_mode = #tpu.pipeline_mode<synchronous>, transform_indices = @transform_7, window_bounds = array<i64: 1, 128>}, {transform_indices = @transform_8, window_bounds = array<i64: 48, 128>}]} {
    %c0 = arith.constant 0 : index
    %c0_0 = arith.constant 0 : index
    %0 = vector.load %arg2[%c0, %c0_0] : memref<48x32xf32, #tpu.memory_space<vmem>>, vector<48x32xf32>
    %1 = arith.negf %0 : vector<48x32xf32>
    %2 = math.exp %1 : vector<48x32xf32>
    %cst = arith.constant 1.000000e+00 : f32
    %3 = vector.broadcast %cst : f32 to vector<48x32xf32>
    %4 = arith.addf %3, %2 : vector<48x32xf32>
    %5 = arith.divf %3, %4 : vector<48x32xf32>
    %6 = arith.mulf %0, %5 : vector<48x32xf32>
    %7 = arith.truncf %6 : vector<48x32xf32> to vector<48x32xbf16>
    %c0_1 = arith.constant 0 : index
    %c0_2 = arith.constant 0 : index
    %8 = vector.load %arg3[%c0_1, %c0_2] : memref<32x32xbf16, #tpu.memory_space<vmem>>, vector<32x32xbf16>
    %cst_3 = arith.constant dense<0.000000e+00> : vector<48x32xf32>
    %9 = tpu.matmul %7, %8, %cst_3 {dimension_numbers = #tpu.dot_dimension_numbers<[1], [0], [0], [1], [0, 0, 1, 1], [], []>} : vector<48x32xbf16>, vector<32x32xbf16>, vector<48x32xf32> -> vector<48x32xf32>
    %c0_4 = arith.constant 0 : index
    %c0_5 = arith.constant 0 : index
    %10 = vector.load %arg5[%c0_4, %c0_5] : memref<1x32xf32, #tpu.memory_space<vmem>>, vector<1x32xf32>
    %11 = vector.broadcast %10 : vector<1x32xf32> to vector<48x32xf32>
    %12 = arith.addf %9, %11 : vector<48x32xf32>
    %c0_6 = arith.constant 0 : index
    %c0_7 = arith.constant 0 : index
    %13 = vector.load %arg4[%c0_6, %c0_7] : memref<32x32xbf16, #tpu.memory_space<vmem>>, vector<32x32xbf16>
    %cst_8 = arith.constant dense<0.000000e+00> : vector<48x32xf32>
    %14 = tpu.matmul %7, %13, %cst_8 {dimension_numbers = #tpu.dot_dimension_numbers<[1], [0], [0], [1], [0, 0, 1, 1], [], []>} : vector<48x32xbf16>, vector<32x32xbf16>, vector<48x32xf32> -> vector<48x32xf32>
    %c0_9 = arith.constant 0 : index
    %c0_10 = arith.constant 0 : index
    %15 = vector.load %arg6[%c0_9, %c0_10] : memref<1x32xf32, #tpu.memory_space<vmem>>, vector<1x32xf32>
    %16 = vector.broadcast %15 : vector<1x32xf32> to vector<48x32xf32>
    %17 = arith.addf %14, %16 : vector<48x32xf32>
    %c0_11 = arith.constant 0 : index
    %c0_12 = arith.constant 0 : index
    %18 = vector.load %arg1[%c0_11, %c0_12] : memref<48x32xf32, #tpu.memory_space<vmem>>, vector<48x32xf32>
    %cst_13 = arith.constant dense<0.000000e+00> : vector<48xf32>
    %19 = vector.multi_reduction <add>, %18, %cst_13 [1] : vector<48x32xf32> to vector<48xf32>
    %20 = vector.shape_cast %19 : vector<48xf32> to vector<48x1xf32>
    %cst_14 = arith.constant 3.200000e+01 : f32
    %21 = vector.broadcast %cst_14 : f32 to vector<48x1xf32>
    %22 = arith.divf %20, %21 : vector<48x1xf32>
    %23 = vector.broadcast %22 : vector<48x1xf32> to vector<48x32xf32>
    %24 = arith.subf %18, %23 : vector<48x32xf32>
    %25 = arith.mulf %24, %24 : vector<48x32xf32>
    %cst_15 = arith.constant dense<0.000000e+00> : vector<48xf32>
    %26 = vector.multi_reduction <add>, %25, %cst_15 [1] : vector<48x32xf32> to vector<48xf32>
    %27 = vector.shape_cast %26 : vector<48xf32> to vector<48x1xf32>
    %cst_16 = arith.constant 3.200000e+01 : f32
    %28 = vector.broadcast %cst_16 : f32 to vector<48x1xf32>
    %29 = arith.divf %27, %28 : vector<48x1xf32>
    %30 = vector.broadcast %22 : vector<48x1xf32> to vector<48x32xf32>
    %31 = arith.subf %18, %30 : vector<48x32xf32>
    %cst_17 = arith.constant 9.99999997E-7 : f32
    %32 = vector.broadcast %cst_17 : f32 to vector<48x1xf32>
    %33 = arith.addf %29, %32 : vector<48x1xf32>
    %34 = math.rsqrt %33 : vector<48x1xf32>
    %35 = vector.broadcast %34 : vector<48x1xf32> to vector<48x32xf32>
    %36 = arith.mulf %31, %35 : vector<48x32xf32>
    %cst_18 = arith.constant 1.000000e+00 : f32
    %37 = vector.broadcast %cst_18 : f32 to vector<48x32xf32>
    %38 = arith.addf %37, %17 : vector<48x32xf32>
    %39 = arith.mulf %36, %38 : vector<48x32xf32>
    %40 = arith.addf %39, %12 : vector<48x32xf32>
    %41 = arith.truncf %40 : vector<48x32xf32> to vector<48x32xbf16>
    %c0_19 = arith.constant 0 : index
    %c0_20 = arith.constant 0 : index
    %42 = vector.load %arg7[%c0_19, %c0_20] : memref<32x128xbf16, #tpu.memory_space<vmem>>, vector<32x128xbf16>
    %cst_21 = arith.constant dense<0.000000e+00> : vector<48x128xf32>
    %43 = tpu.matmul %41, %42, %cst_21 {dimension_numbers = #tpu.dot_dimension_numbers<[1], [0], [0], [1], [0, 0, 1, 1], [], []>} : vector<48x32xbf16>, vector<32x128xbf16>, vector<48x128xf32> -> vector<48x128xf32>
    %c0_22 = arith.constant 0 : index
    %c0_23 = arith.constant 0 : index
    %44 = vector.load %arg8[%c0_22, %c0_23] : memref<1x128xf32, #tpu.memory_space<vmem>>, vector<1x128xf32>
    %45 = vector.broadcast %44 : vector<1x128xf32> to vector<48x128xf32>
    %46 = arith.addf %43, %45 : vector<48x128xf32>
    %c0_24 = arith.constant 0 : index
    %c0_25 = arith.constant 0 : index
    %47 = vector.load %arg9[%c0_24, %c0_25] : memref<48x128xf32, #tpu.memory_space<vmem>>, vector<48x128xf32>
    tpu.vector_store %arg9[%c0_24, %c0_25], %46 {strides = array<i32>} : memref<48x128xf32, #tpu.memory_space<vmem>>, vector<48x128xf32>,
    return
  }
  func.func @transform_0(%arg0: i32) -> (i32, i32) {
    %c0_i32 = arith.constant 0 : i32
    %c0_i32_0 = arith.constant 0 : i32
    return %arg0, %c0_i32 : i32, i32
  }
  func.func @transform_1(%arg0: i32) -> (i32, i32) {
    %c0_i32 = arith.constant 0 : i32
    %c0_i32_0 = arith.constant 0 : i32
    return %arg0, %c0_i32 : i32, i32
  }
  func.func @transform_2(%arg0: i32) -> (i32, i32) {
    %c0_i32 = arith.constant 0 : i32
    %c0_i32_0 = arith.constant 0 : i32
    %c0_i32_1 = arith.constant 0 : i32
    return %c0_i32, %c0_i32_0 : i32, i32
  }
  func.func @transform_3(%arg0: i32) -> (i32, i32) {
    %c0_i32 = arith.constant 0 : i32
    %c0_i32_0 = arith.constant 0 : i32
    %c0_i32_1 = arith.constant 0 : i32
    return %c0_i32, %c0_i32_0 : i32, i32
  }
  func.func @transform_4(%arg0: i32) -> (i32, i32) {
    %c0_i32 = arith.constant 0 : i32
    %c0_i32_0 = arith.constant 0 : i32
    %c0_i32_1 = arith.constant 0 : i32
    return %c0_i32, %c0_i32_0 : i32, i32
  }
  func.func @transform_5(%arg0: i32) -> (i32, i32) {
    %c0_i32 = arith.constant 0 : i32
    %c0_i32_0 = arith.constant 0 : i32
    %c0_i32_1 = arith.constant 0 : i32
    return %c0_i32, %c0_i32_0 : i32, i32
  }
  func.func @transform_6(%arg0: i32) -> (i32, i32) {
    %c0_i32 = arith.constant 0 : i32
    %c0_i32_0 = arith.constant 0 : i32
    %c0_i32_1 = arith.constant 0 : i32
    return %c0_i32, %c0_i32_0 : i32, i32
  }
  func.func @transform_7(%arg0: i32) -> (i32, i32) {
    %c0_i32 = arith.constant 0 : i32
    %c0_i32_0 = arith.constant 0 : i32
    %c0_i32_1 = arith.constant 0 : i32
    return %c0_i32, %c0_i32_0 : i32, i32
  }
  func.func @transform_8(%arg0: i32) -> (i32, i32) {
    %c0_i32 = arith.constant 0 : i32
    %c0_i32_0 = arith.constant 0 : i32
    return %arg0, %c0_i32 : i32, i32
  }
}

</mosaic_0001>

<llo_original>
// kernel: tpu_custom_call.1
$region0: #{tpu_custom_call.1}
  #allocation0 [shape = 'u32[]', space=smem, size = 0x4, offset = 0x4, fixed_abs, tag = 'smem constant byte address 0x4 - core index']
  #allocation1 [shape = 'u32[144,128]{1,0:T(1,128)}', space=vmem, size = 0x12000, scoped, tag = 'internal scratch']
  %s0 = inlined_call_operand.vmem [shape: f32[48,32], index: 0, kind: input, shape index: {}]
  %s1 = inlined_call_operand.vmem [shape: f32[48,32], index: 1, kind: input, shape index: {}]
  %s2 = inlined_call_operand.vmem [shape: bf16[32,32], index: 2, kind: input, shape index: {}]
  %s3 = inlined_call_operand.vmem [shape: bf16[32,32], index: 3, kind: input, shape index: {}]
  %s4 = inlined_call_operand.vmem [shape: f32[1,32], index: 4, kind: input, shape index: {}]
  %s5 = inlined_call_operand.vmem [shape: f32[1,32], index: 5, kind: input, shape index: {}]
  %s6 = inlined_call_operand.vmem [shape: bf16[32,128], index: 6, kind: input, shape index: {}]
  %s7 = inlined_call_operand.vmem [shape: f32[1,128], index: 7, kind: input, shape index: {}]
  %s8 = inlined_call_operand.hbm [shape: f32[48,128], index: 8, kind: output, shape index: {}]
  %s9 = sld [smem:[#allocation0]]
  $region42: #{tpu_custom_call.1} parent=0
    _
  %s11 = ssub.s32 1, %s9
  %s12 = scalar_select 0, %s11, %s9
  $region1: #{tpu_custom_call.1} parent=0
    #allocation2 [shape = 'u8[24576]{0}', space=vmem, size = 0x6000, scoped, tag = 'output window, operand 0, single buffered']
    #allocation3 [shape = 's32[1]{0}', space=sflag, size = 0x4, scoped, tag = 'scoped memory for tpu_custom_call.1']
    %13 = vsyncpa [#allocation3], 0
    // Predicated region
    $region2: #{tpu_custom_call.1} parent=1 // pred_check
      _
    $region3: #{tpu_custom_call.1} parent=1 // pred_check_branch
      %15 = sbr.rel (0) target = $region5
    $region4: #{tpu_custom_call.1} parent=1 // pred_region
      _
    $region5: #{tpu_custom_call.1} parent=1 // pred_fallthru
      _
    // Predicated region
    $region6: #{tpu_custom_call.1} parent=1 // pred_check
      _
    $region7: #{tpu_custom_call.1} parent=1 // pred_check_branch
      %17 = sbr.rel (0) target = $region9
    $region8: #{tpu_custom_call.1} parent=1 // pred_region
      _
    $region9: #{tpu_custom_call.1} parent=1 // pred_fallthru
      _
    // Predicated region
    $region10: #{tpu_custom_call.1} parent=1 // pred_check
      _
    $region11: #{tpu_custom_call.1} parent=1 // pred_check_branch
      %19 = sbr.rel (0) target = $region13
    $region12: #{tpu_custom_call.1} parent=1 // pred_region
      _
    $region13: #{tpu_custom_call.1} parent=1 // pred_fallthru
      _
    // Predicated region
    $region14: #{tpu_custom_call.1} parent=1 // pred_check
      _
    $region15: #{tpu_custom_call.1} parent=1 // pred_check_branch
      %21 = sbr.rel (0) target = $region17
    $region16: #{tpu_custom_call.1} parent=1 // pred_region
      _
    $region17: #{tpu_custom_call.1} parent=1 // pred_fallthru
      _
    // Predicated region
    $region18: #{tpu_custom_call.1} parent=1 // pred_check
      _
    $region19: #{tpu_custom_call.1} parent=1 // pred_check_branch
      %23 = sbr.rel (0) target = $region21
    $region20: #{tpu_custom_call.1} parent=1 // pred_region
      _
    $region21: #{tpu_custom_call.1} parent=1 // pred_fallthru
      _
    // Predicated region
    $region22: #{tpu_custom_call.1} parent=1 // pred_check
      _
    $region23: #{tpu_custom_call.1} parent=1 // pred_check_branch
      %25 = sbr.rel (0) target = $region25
    $region24: #{tpu_custom_call.1} parent=1 // pred_region
      _
    $region25: #{tpu_custom_call.1} parent=1 // pred_fallthru
      _
    // Predicated region
    $region26: #{tpu_custom_call.1} parent=1 // pred_check
      _
    $region27: #{tpu_custom_call.1} parent=1 // pred_check_branch
      %27 = sbr.rel (0) target = $region29
    $region28: #{tpu_custom_call.1} parent=1 // pred_region
      _
    $region29: #{tpu_custom_call.1} parent=1 // pred_fallthru
      _
    // Predicated region
    $region30: #{tpu_custom_call.1} parent=1 // pred_check
      _
    $region31: #{tpu_custom_call.1} parent=1 // pred_check_branch
      %29 = sbr.rel (0) target = $region33
    $region32: #{tpu_custom_call.1} parent=1 // pred_region
      _
    $region33: #{tpu_custom_call.1} parent=1 // pred_fallthru
      _
    %v31 = vld [vmem:[%s1] sm:$0xff]
    %v32 = vld [vmem:[%s1 + $0x8] sm:$0xff]
    %v33 = vld [vmem:[%s1 + $0x10] sm:$0xff]
    %v34 = vld [vmem:[%s1 + $0x18] sm:$0xff]
    %v35 = vld [vmem:[%s1 + $0x20] sm:$0xff]
    %v36 = vld [vmem:[%s1 + $0x28] sm:$0xff]
    %v37 = vxor.u32 %v31, 2147483648
    %v38 = vxor.u32 %v32, 2147483648
    %v39 = vxor.u32 %v33, 2147483648
    %v40 = vxor.u32 %v34, 2147483648
    %v41 = vxor.u32 %v35, 2147483648
    %v42 = vxor.u32 %v36, 2147483648
    %v43 = vmul.f32 %v37, 1.442695
    %v44 = vpow.pop %v43
    %v45 = vmul.f32 %v38, 1.442695
    %v46 = vpow.pop %v45
    %v47 = vmul.f32 %v39, 1.442695
    %v48 = vpow.pop %v47
    %v49 = vmul.f32 %v40, 1.442695
    %v50 = vpow.pop %v49
    %v51 = vmul.f32 %v41, 1.442695
    %v52 = vpow.pop %v51
    %v53 = vmul.f32 %v42, 1.442695
    %v54 = vpow.pop %v53
    %v55 = vadd.f32 %v44, 1.0
    %v56 = vadd.f32 %v46, 1.0
    %v57 = vadd.f32 %v48, 1.0
    %v58 = vadd.f32 %v50, 1.0
    %v59 = vadd.f32 %v52, 1.0
    %v60 = vadd.f32 %v54, 1.0
    %v61 = vrcp.pop %v55
    %v62 = vmul.f32 1.0, %v61
    %v63 = vrcp.pop %v56
    %v64 = vmul.f32 1.0, %v63
    %v65 = vrcp.pop %v57
    %v66 = vmul.f32 1.0, %v65
    %v67 = vrcp.pop %v58
    %v68 = vmul.f32 1.0, %v67
    %v69 = vrcp.pop %v59
    %v70 = vmul.f32 1.0, %v69
    %v71 = vrcp.pop %v60
    %v72 = vmul.f32 1.0, %v71
    %v73 = vmul.f32 %v31, %v62
    %v74 = vmul.f32 %v32, %v64
    %v75 = vmul.f32 %v33, %v66
    %v76 = vmul.f32 %v34, %v68
    %v77 = vmul.f32 %v35, %v70
    %v78 = vmul.f32 %v36, %v72
    %v79 = vpack.c.bf16 %v74, %v73
    %v80 = vpack.c.bf16 %v76, %v75
    %v81 = vpack.c.bf16 %v78, %v77
    %v82 = vld [vmem:[%s2] sm:$0xf]
    %v83 = vld [vmem:[%s2 + $0x4] sm:$0xf]
    %v84 = vld [vmem:[%s2 + $0x8] sm:$0xf]
    %v85 = vld [vmem:[%s2 + $0xc] sm:$0xf]
    %v86 = vld [vmem:[%s4] sm:$0x1]
    %v88 = vlaneseq
    %v89 = vshrl.u32 %v88, 7
    %v90 = vsub.s32 0, %v89
    %v91 = vrot.slane %v86, %v90
    %v97 = vunpack.c.l.b16 %v82
    %v98 = vunpack.c.l.b16 %v83
    %v99 = vunpack.c.l.b16 %v84
    %v100 = vunpack.c.l.b16 %v85
    %v101 = vpack.c.b16 %v98, %v97
    %v102 = vpack.c.b16 %v100, %v99
    %vm105 = vcmask 261120
    %v107 = vsel %vm105, %v79, 0
    %v110 = vsel %vm105, %v80, 0
    %v113 = vsel %vm105, %v81, 0
    %115 = vmatprep.subr.bf16.mxu0 0
    %116 = vmatpush1.bf16.msra.mxu0 0
    %117 = vmatprep.subr.bf16.mxu0 0
    %118 = vmatpush1.bf16.msra.mxu0 0
    %119 = vmatprep.subr.bf16.mxu0 0
    %120 = vmatpush1.bf16.msra.mxu0 0
    %121 = vmatprep.subr.bf16.mxu0 0
    %122 = vmatpush1.bf16.msra.mxu0 0
    %123 = vmatprep.subr.bf16.mxu0 0
    %124 = vmatpush1.bf16.msra.mxu0 0
    %125 = vmatprep.subr.bf16.mxu0 0
    %126 = vmatpush1.bf16.msra.mxu0 0
    %127 = vmatprep.subr.bf16.mxu0 0
    %128 = vmatpush1.bf16.msra.mxu0 %v102
    %129 = vmatprep.subr.bf16.mxu0 0
    %130 = vmatpush1.bf16.msra.mxu0 %v101
    %131 = vmatprep.subr.bf16.mxu0 0
    %132 = vmatpush2.bf16.msra.mxu0 0
    %133 = vmatprep.subr.bf16.mxu0 0
    %134 = vmatpush2.bf16.msra.mxu0 0
    %135 = vmatprep.subr.bf16.mxu0 0
    %136 = vmatpush2.bf16.msra.mxu0 0
    %137 = vmatprep.subr.bf16.mxu0 0
    %138 = vmatpush2.bf16.msra.mxu0 0
    %139 = vmatprep.subr.bf16.mxu0 0
    %140 = vmatpush2.bf16.msra.mxu0 0
    %141 = vmatprep.subr.bf16.mxu0 0
    %142 = vmatpush2.bf16.msra.mxu0 0
    %143 = vmatprep.subr.bf16.mxu0 0
    %144 = vmatpush2.bf16.msra.mxu0 0
    %145 = vmatprep.subr.bf16.mxu0 0
    %146 = vmatpush2.bf16.msra.mxu0 0
    %147 = vmatprep.mubr.bf16.mxu0 0
    %148 = vmatmul.mubr.bf16.gmra.mxu0 %v107
    %v149 = vpop.f32.mrf.mxu0
    %v150 = vadd.f32 %v91, %v149
    %v151 = vpop.f32.mrf.mxu0
    %v152 = vpop.f32.mrf.mxu0
    %v153 = vadd.f32 %v91, %v152
    %v154 = vpop.f32.mrf.mxu0
    %155 = vmatprep.mubr.bf16.mxu0 0
    %156 = vmatmul.mubr.bf16.gmra.mxu0 %v110
    %v157 = vpop.f32.mrf.mxu0
    %v158 = vadd.f32 %v91, %v157
    %v159 = vpop.f32.mrf.mxu0
    %v160 = vpop.f32.mrf.mxu0
    %v161 = vadd.f32 %v91, %v160
    %v162 = vpop.f32.mrf.mxu0
    %163 = vmatprep.mubr.bf16.mxu0 0
    %164 = vmatmul.mubr.bf16.gmra.mxu0 %v113
    %v165 = vpop.f32.mrf.mxu0
    %v166 = vadd.f32 %v91, %v165
    %v167 = vpop.f32.mrf.mxu0
    %v168 = vpop.f32.mrf.mxu0
    %v169 = vadd.f32 %v91, %v168
    %v170 = vpop.f32.mrf.mxu0
    %171 = vdwg.mxu0
    %v172 = vld [vmem:[%s3] sm:$0xf]
    %v173 = vld [vmem:[%s3 + $0x4] sm:$0xf]
    %v174 = vld [vmem:[%s3 + $0x8] sm:$0xf]
    %v175 = vld [vmem:[%s3 + $0xc] sm:$0xf]
    %v176 = vld [vmem:[%s5] sm:$0x1]
    %v178 = vlaneseq
    %v179 = vshrl.u32 %v178, 7
    %v180 = vsub.s32 0, %v179
    %v181 = vrot.slane %v176, %v180
    %v187 = vunpack.c.l.b16 %v172
    %v188 = vunpack.c.l.b16 %v173
    %v189 = vunpack.c.l.b16 %v174
    %v190 = vunpack.c.l.b16 %v175
    %v191 = vpack.c.b16 %v188, %v187
    %v192 = vpack.c.b16 %v190, %v189
    %195 = vmatprep.subr.bf16.mxu0 0
    %196 = vmatpush1.bf16.msra.mxu0 0
    %197 = vmatprep.subr.bf16.mxu0 0
    %198 = vmatpush1.bf16.msra.mxu0 0
    %199 = vmatprep.subr.bf16.mxu0 0
    %200 = vmatpush1.bf16.msra.mxu0 0
    %201 = vmatprep.subr.bf16.mxu0 0
    %202 = vmatpush1.bf16.msra.mxu0 0
    %203 = vmatprep.subr.bf16.mxu0 0
    %204 = vmatpush1.bf16.msra.mxu0 0
    %205 = vmatprep.subr.bf16.mxu0 0
    %206 = vmatpush1.bf16.msra.mxu0 0
    %207 = vmatprep.subr.bf16.mxu0 0
    %208 = vmatpush1.bf16.msra.mxu0 %v192
    %209 = vmatprep.subr.bf16.mxu0 0
    %210 = vmatpush1.bf16.msra.mxu0 %v191
    %211 = vmatprep.subr.bf16.mxu0 0
    %212 = vmatpush2.bf16.msra.mxu0 0
    %213 = vmatprep.subr.bf16.mxu0 0
    %214 = vmatpush2.bf16.msra.mxu0 0
    %215 = vmatprep.subr.bf16.mxu0 0
    %216 = vmatpush2.bf16.msra.mxu0 0
    %217 = vmatprep.subr.bf16.mxu0 0
    %218 = vmatpush2.bf16.msra.mxu0 0
    %219 = vmatprep.subr.bf16.mxu0 0
    %220 = vmatpush2.bf16.msra.mxu0 0
    %221 = vmatprep.subr.bf16.mxu0 0
    %222 = vmatpush2.bf16.msra.mxu0 0
    %223 = vmatprep.subr.bf16.mxu0 0
    %224 = vmatpush2.bf16.msra.mxu0 0
    %225 = vmatprep.subr.bf16.mxu0 0
    %226 = vmatpush2.bf16.msra.mxu0 0
    %227 = vmatprep.mubr.bf16.mxu0 0
    %228 = vmatmul.mubr.bf16.gmra.mxu0 %v107
    %v229 = vpop.f32.mrf.mxu0
    %v230 = vadd.f32 %v181, %v229
    %v231 = vpop.f32.mrf.mxu0
    %v232 = vpop.f32.mrf.mxu0
    %v233 = vadd.f32 %v181, %v232
    %v234 = vpop.f32.mrf.mxu0
    %235 = vmatprep.mubr.bf16.mxu0 0
    %236 = vmatmul.mubr.bf16.gmra.mxu0 %v110
    %v237 = vpop.f32.mrf.mxu0
    %v238 = vadd.f32 %v181, %v237
    %v239 = vpop.f32.mrf.mxu0
    %v240 = vpop.f32.mrf.mxu0
    %v241 = vadd.f32 %v181, %v240
    %v242 = vpop.f32.mrf.mxu0
    %243 = vmatprep.mubr.bf16.mxu0 0
    %244 = vmatmul.mubr.bf16.gmra.mxu0 %v113
    %v245 = vpop.f32.mrf.mxu0
    %v246 = vadd.f32 %v181, %v245
    %v247 = vpop.f32.mrf.mxu0
    %v248 = vpop.f32.mrf.mxu0
    %v249 = vadd.f32 %v181, %v248
    %v250 = vpop.f32.mrf.mxu0
    %251 = vdwg.mxu0
    %v252 = vld [vmem:[%s0] sm:$0xff]
    %v253 = vld [vmem:[%s0 + $0x8] sm:$0xff]
    %v254 = vld [vmem:[%s0 + $0x10] sm:$0xff]
    %v255 = vld [vmem:[%s0 + $0x18] sm:$0xff]
    %v256 = vld [vmem:[%s0 + $0x20] sm:$0xff]
    %v257 = vld [vmem:[%s0 + $0x28] sm:$0xff]
    %v258 = vsel %vm105, %v252, 0.0
    %259 = vadd.xlane.f32.xlu0 %v258
    %v260 = vpop.xlane.xlu0 %259
    %v261 = vsel %vm105, %v253, 0.0
    %262 = vadd.xlane.f32.xlu0 %v261
    %v263 = vpop.xlane.xlu0 %262
    %v264 = vsel %vm105, %v254, 0.0
    %265 = vadd.xlane.f32.xlu0 %v264
    %v266 = vpop.xlane.xlu0 %265
    %v267 = vsel %vm105, %v255, 0.0
    %268 = vadd.xlane.f32.xlu0 %v267
    %v269 = vpop.xlane.xlu0 %268
    %v270 = vsel %vm105, %v256, 0.0
    %271 = vadd.xlane.f32.xlu0 %v270
    %v272 = vpop.xlane.xlu0 %271
    %v273 = vsel %vm105, %v257, 0.0
    %274 = vadd.xlane.f32.xlu0 %v273
    %v275 = vpop.xlane.xlu0 %274
    %v276 = vrcp.pop 32.0
    %v277 = vmul.f32 %v260, %v276
    %v278 = vmul.f32 %v263, %v276
    %v279 = vmul.f32 %v266, %v276
    %v280 = vmul.f32 %v269, %v276
    %v281 = vmul.f32 %v272, %v276
    %v282 = vmul.f32 %v275, %v276
    %v283 = vsub.f32 %v252, %v277
    %v284 = vsub.f32 %v253, %v278
    %v285 = vsub.f32 %v254, %v279
    %v286 = vsub.f32 %v255, %v280
    %v287 = vsub.f32 %v256, %v281
    %v288 = vsub.f32 %v257, %v282
    %v289 = vmul.f32 %v283, %v283
    %v290 = vmul.f32 %v284, %v284
    %v291 = vmul.f32 %v285, %v285
    %v292 = vmul.f32 %v286, %v286
    %v293 = vmul.f32 %v287, %v287
    %v294 = vmul.f32 %v288, %v288
    %v295 = vsel %vm105, %v289, 0.0
    %296 = vadd.xlane.f32.xlu0 %v295
    %v297 = vpop.xlane.xlu0 %296
    %v298 = vsel %vm105, %v290, 0.0
    %299 = vadd.xlane.f32.xlu0 %v298
    %v300 = vpop.xlane.xlu0 %299
    %v301 = vsel %vm105, %v291, 0.0
    %302 = vadd.xlane.f32.xlu0 %v301
    %v303 = vpop.xlane.xlu0 %302
    %v304 = vsel %vm105, %v292, 0.0
    %305 = vadd.xlane.f32.xlu0 %v304
    %v306 = vpop.xlane.xlu0 %305
    %v307 = vsel %vm105, %v293, 0.0
    %308 = vadd.xlane.f32.xlu0 %v307
    %v309 = vpop.xlane.xlu0 %308
    %v310 = vsel %vm105, %v294, 0.0
    %311 = vadd.xlane.f32.xlu0 %v310
    %v312 = vpop.xlane.xlu0 %311
    %v313 = vmul.f32 %v297, %v276
    %v314 = vmul.f32 %v300, %v276
    %v315 = vmul.f32 %v303, %v276
    %v316 = vmul.f32 %v306, %v276
    %v317 = vmul.f32 %v309, %v276
    %v318 = vmul.f32 %v312, %v276
    %v319 = vadd.f32 %v313, 1e-06
    %v320 = vadd.f32 %v314, 1e-06
    %v321 = vadd.f32 %v315, 1e-06
    %v322 = vadd.f32 %v316, 1e-06
    %v323 = vadd.f32 %v317, 1e-06
    %v324 = vadd.f32 %v318, 1e-06
    %v325 = vrsqrt.pop %v319
    %v326 = vrsqrt.pop %v320
    %v327 = vrsqrt.pop %v321
    %v328 = vrsqrt.pop %v322
    %v329 = vrsqrt.pop %v323
    %v330 = vrsqrt.pop %v324
    %v331 = vmul.f32 %v283, %v325
    %v332 = vmul.f32 %v284, %v326
    %v333 = vmul.f32 %v285, %v327
    %v334 = vmul.f32 %v286, %v328
    %v335 = vmul.f32 %v287, %v329
    %v336 = vmul.f32 %v288, %v330
    %v337 = vadd.f32 %v230, 1.0
    %v338 = vadd.f32 %v233, 1.0
    %v339 = vadd.f32 %v238, 1.0
    %v340 = vadd.f32 %v241, 1.0
    %v341 = vadd.f32 %v246, 1.0
    %v342 = vadd.f32 %v249, 1.0
    %v343 = vmul.f32 %v331, %v337
    %v344 = vmul.f32 %v332, %v338
    %v345 = vmul.f32 %v333, %v339
    %v346 = vmul.f32 %v334, %v340
    %v347 = vmul.f32 %v335, %v341
    %v348 = vmul.f32 %v336, %v342
    %v349 = vadd.f32 %v343, %v150
    %v350 = vadd.f32 %v344, %v153
    %v351 = vadd.f32 %v345, %v158
    %v352 = vadd.f32 %v346, %v161
    %v353 = vadd.f32 %v347, %v166
    %v354 = vadd.f32 %v348, %v169
    %v355 = vpack.c.bf16 %v350, %v349
    %v356 = vpack.c.bf16 %v352, %v351
    %v357 = vpack.c.bf16 %v354, %v353
    %v358 = vld [vmem:[%s6] sm:$0xf]
    %v359 = vld [vmem:[%s6 + $0x4] sm:$0xf]
    %v360 = vld [vmem:[%s6 + $0x8] sm:$0xf]
    %v361 = vld [vmem:[%s6 + $0xc] sm:$0xf]
    %v362 = vld [vmem:[%s7] sm:$0x1]
    %v364 = vlaneseq
    %v365 = vshrl.u32 %v364, 7
    %v366 = vsub.s32 0, %v365
    %v367 = vrot.slane %v362, %v366
    %v373 = vunpack.c.l.b16 %v358
    %v374 = vunpack.c.l.b16 %v359
    %v375 = vunpack.c.l.b16 %v360
    %v376 = vunpack.c.l.b16 %v361
    %v377 = vpack.c.b16 %v374, %v373
    %v378 = vpack.c.b16 %v376, %v375
    %v382 = vsel %vm105, %v355, 0
    %v385 = vsel %vm105, %v356, 0
    %v388 = vsel %vm105, %v357, 0
    %390 = vmatprep.subr.bf16.mxu0 0
    %391 = vmatpush1.bf16.msra.mxu0 0
    %392 = vmatprep.subr.bf16.mxu0 0
    %393 = vmatpush1.bf16.msra.mxu0 0
    %394 = vmatprep.subr.bf16.mxu0 0
    %395 = vmatpush1.bf16.msra.mxu0 0
    %396 = vmatprep.subr.bf16.mxu0 0
    %397 = vmatpush1.bf16.msra.mxu0 0
    %398 = vmatprep.subr.bf16.mxu0 0
    %399 = vmatpush1.bf16.msra.mxu0 0
    %400 = vmatprep.subr.bf16.mxu0 0
    %401 = vmatpush1.bf16.msra.mxu0 0
    %402 = vmatprep.subr.bf16.mxu0 0
    %403 = vmatpush1.bf16.msra.mxu0 %v378
    %404 = vmatprep.subr.bf16.mxu0 0
    %405 = vmatpush1.bf16.msra.mxu0 %v377
    %406 = vmatprep.subr.bf16.mxu0 0
    %407 = vmatpush2.bf16.msra.mxu0 0
    %408 = vmatprep.subr.bf16.mxu0 0
    %409 = vmatpush2.bf16.msra.mxu0 0
    %410 = vmatprep.subr.bf16.mxu0 0
    %411 = vmatpush2.bf16.msra.mxu0 0
    %412 = vmatprep.subr.bf16.mxu0 0
    %413 = vmatpush2.bf16.msra.mxu0 0
    %414 = vmatprep.subr.bf16.mxu0 0
    %415 = vmatpush2.bf16.msra.mxu0 0
    %416 = vmatprep.subr.bf16.mxu0 0
    %417 = vmatpush2.bf16.msra.mxu0 0
    %418 = vmatprep.subr.bf16.mxu0 0
    %419 = vmatpush2.bf16.msra.mxu0 0
    %420 = vmatprep.subr.bf16.mxu0 0
    %421 = vmatpush2.bf16.msra.mxu0 0
    %422 = vmatprep.mubr.bf16.mxu0 0
    %423 = vmatmul.mubr.bf16.gmra.mxu0 %v382
    %v424 = vpop.f32.mrf.mxu0
    %v425 = vadd.f32 %v367, %v424
    %v426 = vpop.f32.mrf.mxu0
    %v427 = vpop.f32.mrf.mxu0
    %v428 = vadd.f32 %v367, %v427
    %v429 = vpop.f32.mrf.mxu0
    %430 = vmatprep.mubr.bf16.mxu0 0
    %431 = vmatmul.mubr.bf16.gmra.mxu0 %v385
    %v432 = vpop.f32.mrf.mxu0
    %v433 = vadd.f32 %v367, %v432
    %v434 = vpop.f32.mrf.mxu0
    %v435 = vpop.f32.mrf.mxu0
    %v436 = vadd.f32 %v367, %v435
    %v437 = vpop.f32.mrf.mxu0
    %438 = vmatprep.mubr.bf16.mxu0 0
    %439 = vmatmul.mubr.bf16.gmra.mxu0 %v388
    %v440 = vpop.f32.mrf.mxu0
    %v441 = vadd.f32 %v367, %v440
    %v442 = vpop.f32.mrf.mxu0
    %v443 = vpop.f32.mrf.mxu0
    %v444 = vadd.f32 %v367, %v443
    %v445 = vpop.f32.mrf.mxu0
    %446 = vdwg.mxu0
    %447 = vst [vmem:[#allocation2] sm:$0xff] %v425
    %448 = vst [vmem:[#allocation2 + $0x8] sm:$0xff] %v428
    %449 = vst [vmem:[#allocation2 + $0x10] sm:$0xff] %v433
    %450 = vst [vmem:[#allocation2 + $0x18] sm:$0xff] %v436
    %451 = vst [vmem:[#allocation2 + $0x20] sm:$0xff] %v441
    %452 = vst [vmem:[#allocation2 + $0x28] sm:$0xff] %v444
    // Predicated region
    $region34: #{tpu_custom_call.1} parent=1 // pred_check
      _
    $region35: #{tpu_custom_call.1} parent=1 // pred_check_branch
      %454 = sbr.rel (0) target = $region37
    $region36: #{tpu_custom_call.1} parent=1 // pred_region
      %s456 = ssub.s32 768, 768
      %457 = vsyncadd [#allocation3], %s456
      %s458 = sshll.u32 [#allocation2], 4
      %s459 = int_to_ptr.vmem [resolvable:$true] %s458
      %464 = dma.vmem_to_hbm [thread:$0]  %s459, 768, %s8, [#allocation3], 128, 128, 8
    $region37: #{tpu_custom_call.1} parent=1 // pred_fallthru
      _
    // Predicated region
    $region38: #{tpu_custom_call.1} parent=1 // pred_check
      _
    $region39: #{tpu_custom_call.1} parent=1 // pred_check_branch
      %466 = sbr.rel (0) target = $region41
    $region40: #{tpu_custom_call.1} parent=1 // pred_region
      %467 = dma.done [#allocation3], 768
    $region41: #{tpu_custom_call.1} parent=1 // pred_fallthru
      _
    %468 = vsyncpa [#allocation3], 1

</llo_original>
